<compile_context>
chip_gen: v7x
topology: tpu7x:2x2x1
jax: 0.10.0
libtpu: 0.0.40
codegen_flags: <defaults>
</compile_context>

<pallas_src>
import math

import jax
import jax.numpy as jnp
from jax import lax
from jax.experimental import pallas as pl
from jax.experimental.pallas import tpu as pltpu


def lgml2_kernel(x_ref, lflat_ref, wb_ref, seg_ref, o_ref):
    # x_ref:     (B, F)
    # lflat_ref: (F, TK*F)   column k*F+g holds L[k, f, g] for this k-block
    # wb_ref:    (F, TK*F)   column k*F+g holds weight[k, 0, f]
    # seg_ref:   (TK*F, TK)  constant 0/1 segment-sum matrix
    # o_ref:     (B, TK)
    x = x_ref[...]
    Lb = lflat_ref[...]
    # x-side contraction for all TK output units in one MXU pass (N = TK*F).
    px = jnp.dot(x, Lb, preferred_element_type=jnp.float32)            # (B, TK*F)
    # w-side term: pw[k*F+g] = sum_f w[k,f] * L[k,f,g]  (VPU mul + XLU reduce;
    # replaces the old 1-row MXU matmul).
    pw = jnp.sum((wb_ref[...] * Lb).astype(jnp.float32),
                 axis=0, keepdims=True)                                 # (1, TK*F)
    d = px - pw                                                         # (B, TK*F)
    # per-k sum of squares via a 0/1 matmul (stays lane-dense), sqrt on the EUP.
    ssq = jnp.dot(d * d, seg_ref[...], preferred_element_type=jnp.float32)  # (B, TK)
    o_ref[...] = jnp.sqrt(ssq).astype(o_ref.dtype)


def build_L(L_diags, L_lower):
    """Assemble (K, F, F): diag = L_diags**2, strict lower triangle = L_lower
    in torch.tril_indices (row-major) order.  Mask/gather based, no scatters."""
    K, F = L_diags.shape
    row = lax.broadcasted_iota(jnp.int32, (F, F), 0)
    col = lax.broadcasted_iota(jnp.int32, (F, F), 1)
    lower_mask = row > col
    # flat row-major tril index for (i, j), i > j:  i*(i-1)/2 + j
    tril_idx = jnp.where(lower_mask, (row * (row - 1)) // 2 + col, 0)   # (F, F)
    lower_full = jnp.take(L_lower, tril_idx.reshape(-1), axis=1).reshape(K, F, F)
    zero = jnp.zeros((), L_diags.dtype)
    L = jnp.where(lower_mask[None, :, :], lower_full, zero)
    L = jnp.where((row == col)[None, :, :], jnp.square(L_diags)[:, :, None], L)
    return L


def linear_gml2_forward(x, weight, L_diags, L_lower, *, tk=None):
    B, F = x.shape
    K = weight.shape[0]
    if tk is None:
        # Single grid step for small K; 128-multiple blocks for huge K so the
        # (B, tk) output block is legal and the axis can shard across cores.
        tk = K if (K <= 128 or K % 128 != 0) else 128
    assert K % tk == 0 and (tk == K or tk % 128 == 0)

    L = build_L(L_diags, L_lower)                                       # (K, F, F)
    # lane-dense layouts consumed by the kernel
    L_flat = jnp.transpose(L, (1, 0, 2)).reshape(F, K * F)              # [f, k*F+g] = L[k,f,g]
    w2 = weight[:, 0, :]                                                # (K, F)
    w_bcast = jnp.broadcast_to(w2.T[:, :, None], (F, K, F)).reshape(F, K * F)
    # constant 0/1 segment-sum matrix (identical for every k-block)
    seg_id = jnp.arange(tk * F, dtype=jnp.int32) // F
    seg = (seg_id[:, None] == jnp.arange(tk, dtype=jnp.int32)[None, :]
           ).astype(jnp.float32)                                        # (tk*F, tk)

    # TODO(synk): for very large F the (F, tk*F) L block must additionally be
    # tiled over F (accumulating sum-of-squares) to fit v7x/v5e VMEM budgets.
    return pl.pallas_call(
        lgml2_kernel,
        out_shape=jax.ShapeDtypeStruct((B, K), jnp.float32),
        grid=(K // tk,),
        in_specs=[
            pl.BlockSpec((B, F), lambda kb: (0, 0)),          # x (shared)
            pl.BlockSpec((F, tk * F), lambda kb: (0, kb)),    # L_flat block
            pl.BlockSpec((F, tk * F), lambda kb: (0, kb)),    # w broadcast block
            pl.BlockSpec((tk * F, tk), lambda kb: (0, 0)),    # segment-sum matrix
        ],
        out_specs=pl.BlockSpec((B, tk), lambda kb: (0, kb)),  # lane-dense (B, K)
        compiler_params=pltpu.CompilerParams(
            dimension_semantics=("parallel",)),
    )(x, L_flat, w_bcast, seg)


def reference_forward(x, weight, L_diags, L_lower):
    """Plain-JAX replica of LinearGML2.forward for verification."""
    L = build_L(L_diags, L_lower)                                       # (K, F, F)
    pinputs = jnp.einsum("bf,kfg->kbg", x, L)                           # (K, B, F)
    pweights = jnp.einsum("kif,kfg->kig", weight, L)                    # (K, 1, F)
    dist = pinputs - pweights                                           # (K, B, F)
    out = jnp.sqrt(jnp.sum(dist * dist, axis=2))                        # (K, B)
    return out.T                                                        # (B, K)


if __name__ == "__main__":
    B = 8            # batch
    in_features = 32
    out_features = 16

    key = jax.random.PRNGKey(0)
    k_w, k_d, k_l, k_x = jax.random.split(key, 4)

    # weight: kaiming_uniform_(a=sqrt(5)) on (K, 1, F) -> U(-1/sqrt(F), 1/sqrt(F))
    bound = 1.0 / math.sqrt(in_features)
    weight = jax.random.uniform(
        k_w, (out_features, 1, in_features), jnp.float32, -bound, bound)
    # L_diags / L_lower: module init is (1, 0); use small deterministic random
    # values instead so the x @ L_k path is exercised non-trivially.
    L_diags = jax.random.uniform(
        k_d, (out_features, in_features), jnp.float32, 0.5, 1.5)
    L_lower = jax.random.uniform(
        k_l, (out_features, in_features * (in_features - 1) // 2),
        jnp.float32, -0.1, 0.1)
    # prec_decomp is only used for its shape (zeros_like) in the module; skipped.

    x = jax.random.normal(k_x, (B, in_features), jnp.float32)

    fwd = jax.jit(linear_gml2_forward)
    out = jax.block_until_ready(fwd(x, weight, L_diags, L_lower))
    ref = reference_forward(x, weight, L_diags, L_lower)

    assert out.shape == (B, out_features), out.shape
    assert jnp.allclose(out, ref, rtol=1e-4, atol=1e-5), (
        float(jnp.max(jnp.abs(out - ref))))
    print("KERNEL_OK")
</pallas_src>

<mosaic_0001>
module attributes {stable_mosaic.version = 11 : i64} {
  func.func @lgml2_kernel(%arg0: i32, %arg1: memref<8x32xf32, #tpu.memory_space<vmem>>, %arg2: memref<32x512xf32, #tpu.memory_space<vmem>>, %arg3: memref<32x512xf32, #tpu.memory_space<vmem>>, %arg4: memref<512x16xf32, #tpu.memory_space<vmem>>, %arg5: memref<8x16xf32, #tpu.memory_space<vmem>>) attributes {dimension_semantics = [#tpu.dimension_semantics<parallel>], iteration_bounds = array<i64: 1>, scalar_prefetch = 0 : i64, scratch_operands = 0 : i64, tpu.core_type = #tpu.core_type<tc>, window_params = [{pipeline_mode = #tpu.pipeline_mode<synchronous>, transform_indices = @transform_0, window_bounds = array<i64: 8, 32>}, {transform_indices = @transform_1, window_bounds = array<i64: 32, 512>}, {transform_indices = @transform_2, window_bounds = array<i64: 32, 512>}, {pipeline_mode = #tpu.pipeline_mode<synchronous>, transform_indices = @transform_3, window_bounds = array<i64: 512, 16>}, {transform_indices = @transform_4, window_bounds = array<i64: 8, 16>}]} {
    %c0 = arith.constant 0 : index
    %c0_0 = arith.constant 0 : index
    %0 = vector.load %arg1[%c0, %c0_0] : memref<8x32xf32, #tpu.memory_space<vmem>>, vector<8x32xf32>
    %c0_1 = arith.constant 0 : index
    %c0_2 = arith.constant 0 : index
    %1 = vector.load %arg2[%c0_1, %c0_2] : memref<32x512xf32, #tpu.memory_space<vmem>>, vector<32x512xf32>
    %cst = arith.constant dense<0.000000e+00> : vector<8x512xf32>
    %2 = tpu.matmul %0, %1, %cst {dimension_numbers = #tpu.dot_dimension_numbers<[1], [0], [0], [1], [0, 0, 1, 1], [], []>} : vector<8x32xf32>, vector<32x512xf32>, vector<8x512xf32> -> vector<8x512xf32>
    %c0_3 = arith.constant 0 : index
    %c0_4 = arith.constant 0 : index
    %3 = vector.load %arg3[%c0_3, %c0_4] : memref<32x512xf32, #tpu.memory_space<vmem>>, vector<32x512xf32>
    %4 = arith.mulf %3, %1 : vector<32x512xf32>
    %cst_5 = arith.constant dense<0.000000e+00> : vector<512xf32>
    %5 = vector.multi_reduction <add>, %4, %cst_5 [0] : vector<32x512xf32> to vector<512xf32>
    %6 = vector.shape_cast %5 : vector<512xf32> to vector<1x512xf32>
    %7 = vector.broadcast %6 : vector<1x512xf32> to vector<8x512xf32>
    %8 = arith.subf %2, %7 : vector<8x512xf32>
    %9 = arith.mulf %8, %8 : vector<8x512xf32>
    %c0_6 = arith.constant 0 : index
    %c0_7 = arith.constant 0 : index
    %10 = vector.load %arg4[%c0_6, %c0_7] : memref<512x16xf32, #tpu.memory_space<vmem>>, vector<512x16xf32>
    %cst_8 = arith.constant dense<0.000000e+00> : vector<8x16xf32>
    %11 = tpu.matmul %9, %10, %cst_8 {dimension_numbers = #tpu.dot_dimension_numbers<[1], [0], [0], [1], [0, 0, 1, 1], [], []>} : vector<8x512xf32>, vector<512x16xf32>, vector<8x16xf32> -> vector<8x16xf32>
    %12 = math.sqrt %11 : vector<8x16xf32>
    %c0_9 = arith.constant 0 : index
    %c0_10 = arith.constant 0 : index
    %13 = vector.load %arg5[%c0_9, %c0_10] : memref<8x16xf32, #tpu.memory_space<vmem>>, vector<8x16xf32>
    tpu.vector_store %arg5[%c0_9, %c0_10], %12 {strides = array<i32>} : memref<8x16xf32, #tpu.memory_space<vmem>>, vector<8x16xf32>,
    return
  }
  func.func @transform_0(%arg0: i32) -> (i32, i32) {
    %c0_i32 = arith.constant 0 : i32
    %c0_i32_0 = arith.constant 0 : i32
    %c0_i32_1 = arith.constant 0 : i32
    return %c0_i32, %c0_i32_0 : i32, i32
  }
  func.func @transform_1(%arg0: i32) -> (i32, i32) {
    %c0_i32 = arith.constant 0 : i32
    %c0_i32_0 = arith.constant 0 : i32
    return %c0_i32, %arg0 : i32, i32
  }
  func.func @transform_2(%arg0: i32) -> (i32, i32) {
    %c0_i32 = arith.constant 0 : i32
    %c0_i32_0 = arith.constant 0 : i32
    return %c0_i32, %arg0 : i32, i32
  }
  func.func @transform_3(%arg0: i32) -> (i32, i32) {
    %c0_i32 = arith.constant 0 : i32
    %c0_i32_0 = arith.constant 0 : i32
    %c0_i32_1 = arith.constant 0 : i32
    return %c0_i32, %c0_i32_0 : i32, i32
  }
  func.func @transform_4(%arg0: i32) -> (i32, i32) {
    %c0_i32 = arith.constant 0 : i32
    %c0_i32_0 = arith.constant 0 : i32
    return %c0_i32, %arg0 : i32, i32
  }
}

</mosaic_0001>

<llo_original>
// kernel: square.1
$region0: #{square.1}
  #allocation0 [shape = 's32[1]{0}', space=sflag, size = 0x4, scoped, tag = 'scoped memory for square.1']
  %s0 = inlined_call_operand.vmem [shape: f32[16,32], index: 0, kind: input, shape index: {}, may-alias: {0,1}]
  %s1 = inlined_call_operand.vmem [shape: f32[16,32], index: 1, kind: input, shape index: {}, may-alias: {0,1}]
  %s2 = inlined_call_operand.vmem [shape: f32[16,32], index: 2, kind: output, shape index: {}]
  %v3 = vld [vmem:[%s0] sm:$0xff]
  %v4 = vld [vmem:[%s1] sm:$0xff]
  %5 = xla_tuple %v3, %v4
  %6 = xla_tuple %5
  %v7 = vmul.f32 %v3, %v4
  %8 = xla_tuple %v7
  %9 = vst [vmem:[%s2] sm:$0xff] %v7
  %s10 = scalar_lea.vmem %s0, 8
  %v11 = vld [vmem:[%s10] sm:$0xff]
  %s12 = scalar_lea.vmem %s1, 8
  %v13 = vld [vmem:[%s12] sm:$0xff]
  %14 = xla_tuple %v11, %v13
  %15 = xla_tuple %14
  %v16 = vmul.f32 %v11, %v13
  %17 = xla_tuple %v16
  %s18 = scalar_lea.vmem %s2, 8
  %19 = vst [vmem:[%s18] sm:$0xff] %v16

// kernel: linear_gml2_forward.1
$region0: #{linear_gml2_forward.1}
  #allocation0 [shape = 'u32[]', space=smem, size = 0x4, offset = 0x4, fixed_abs, tag = 'smem constant byte address 0x4 - core index']
  #allocation1 [shape = 'u32[144,128]{1,0:T(1,128)}', space=vmem, size = 0x12000, scoped, tag = 'internal scratch']
  %s0 = inlined_call_operand.vmem [shape: f32[8,32], index: 0, kind: input, shape index: {}]
  %s1 = inlined_call_operand.vmem [shape: f32[32,512], index: 1, kind: input, shape index: {}]
  %s2 = inlined_call_operand.vmem [shape: f32[32,512], index: 2, kind: input, shape index: {}]
  %s3 = inlined_call_operand.vmem [shape: f32[512,16], index: 3, kind: input, shape index: {}]
  %s4 = inlined_call_operand.hbm [shape: f32[8,16], index: 4, kind: output, shape index: {}]
  %s5 = sld [smem:[#allocation0]]
  $region26: #{linear_gml2_forward.1} parent=0
    _
  %s7 = ssub.s32 1, %s5
  %s8 = scalar_select 0, %s7, %s5
  $region1: #{linear_gml2_forward.1} parent=0
    #allocation2 [shape = 'u8[4096]{0}', space=vmem, size = 0x1000, scoped, tag = 'output window, operand 0, single buffered']
    #allocation3 [shape = 's32[1]{0}', space=sflag, size = 0x4, scoped, tag = 'scoped memory for linear_gml2_forward.1']
    %9 = vsyncpa [#allocation3], 0
    // Predicated region
    $region2: #{linear_gml2_forward.1} parent=1 // pred_check
      _
    $region3: #{linear_gml2_forward.1} parent=1 // pred_check_branch
      %11 = sbr.rel (0) target = $region5
    $region4: #{linear_gml2_forward.1} parent=1 // pred_region
      _
    $region5: #{linear_gml2_forward.1} parent=1 // pred_fallthru
      _
    // Predicated region
    $region6: #{linear_gml2_forward.1} parent=1 // pred_check
      _
    $region7: #{linear_gml2_forward.1} parent=1 // pred_check_branch
      %13 = sbr.rel (0) target = $region9
    $region8: #{linear_gml2_forward.1} parent=1 // pred_region
      _
    $region9: #{linear_gml2_forward.1} parent=1 // pred_fallthru
      _
    // Predicated region
    $region10: #{linear_gml2_forward.1} parent=1 // pred_check
      _
    $region11: #{linear_gml2_forward.1} parent=1 // pred_check_branch
      %15 = sbr.rel (0) target = $region13
    $region12: #{linear_gml2_forward.1} parent=1 // pred_region
      _
    $region13: #{linear_gml2_forward.1} parent=1 // pred_fallthru
      _
    // Predicated region
    $region14: #{linear_gml2_forward.1} parent=1 // pred_check
      _
    $region15: #{linear_gml2_forward.1} parent=1 // pred_check_branch
      %17 = sbr.rel (0) target = $region17
    $region16: #{linear_gml2_forward.1} parent=1 // pred_region
      _
    $region17: #{linear_gml2_forward.1} parent=1 // pred_fallthru
      _
    %v18 = vld [vmem:[%s0] sm:$0xff]
    %v19 = vld [vmem:[%s1] sm:$0xff]
    %v20 = vld [vmem:[%s1 + $0x8] sm:$0xff]
    %v21 = vld [vmem:[%s1 + $0x10] sm:$0xff]
    %v22 = vld [vmem:[%s1 + $0x18] sm:$0xff]
    %v23 = vld [vmem:[%s1 + $0x20] sm:$0xff]
    %v24 = vld [vmem:[%s1 + $0x28] sm:$0xff]
    %v25 = vld [vmem:[%s1 + $0x30] sm:$0xff]
    %v26 = vld [vmem:[%s1 + $0x38] sm:$0xff]
    %v27 = vld [vmem:[%s1 + $0x40] sm:$0xff]
    %v28 = vld [vmem:[%s1 + $0x48] sm:$0xff]
    %v29 = vld [vmem:[%s1 + $0x50] sm:$0xff]
    %v30 = vld [vmem:[%s1 + $0x58] sm:$0xff]
    %v31 = vld [vmem:[%s1 + $0x60] sm:$0xff]
    %v32 = vld [vmem:[%s1 + $0x68] sm:$0xff]
    %v33 = vld [vmem:[%s1 + $0x70] sm:$0xff]
    %v34 = vld [vmem:[%s1 + $0x78] sm:$0xff]
    %vm35 = vcmask 261120
    %v37 = vsel %vm35, %v18, 0
    %39 = vmatprep.subr.mxu0 %v20
    %40 = vmatpush1.msra.mxu0 %v19
    %41 = vmatprep.subr.mxu0 %v24
    %42 = vmatpush1.msra.mxu0 %v23
    %43 = vmatprep.subr.mxu0 %v28
    %44 = vmatpush1.msra.mxu0 %v27
    %45 = vmatprep.subr.mxu0 %v32
    %46 = vmatpush1.msra.mxu0 %v31
    %47 = vmatprep.subr.mxu0 0.0
    %48 = vmatpush1.msra.mxu0 0.0
    %49 = vmatprep.subr.mxu0 0.0
    %50 = vmatpush1.msra.mxu0 0.0
    %51 = vmatprep.subr.mxu0 0.0
    %52 = vmatpush1.msra.mxu0 0.0
    %53 = vmatprep.subr.mxu0 0.0
    %54 = vmatpush1.msra.mxu0 0.0
    %55 = vmatprep.subr.mxu0 0.0
    %56 = vmatpush1.msra.mxu0 0.0
    %57 = vmatprep.subr.mxu0 0.0
    %58 = vmatpush1.msra.mxu0 0.0
    %59 = vmatprep.subr.mxu0 0.0
    %60 = vmatpush1.msra.mxu0 0.0
    %61 = vmatprep.subr.mxu0 0.0
    %62 = vmatpush1.msra.mxu0 0.0
    %63 = vmatprep.subr.mxu0 0.0
    %64 = vmatpush1.msra.mxu0 0.0
    %65 = vmatprep.subr.mxu0 0.0
    %66 = vmatpush1.msra.mxu0 0.0
    %67 = vmatprep.subr.mxu0 0.0
    %68 = vmatpush1.msra.mxu0 0.0
    %69 = vmatprep.subr.mxu0 0.0
    %70 = vmatpush1.msra.mxu0 0.0
    %71 = vmatprep.subr.mxu0 0.0
    %72 = vmatpush1.msra.mxu0 0.0
    %73 = vmatprep.subr.mxu0 0.0
    %74 = vmatpush1.msra.mxu0 0.0
    %75 = vmatprep.subr.mxu0 0.0
    %76 = vmatpush1.msra.mxu0 0.0
    %77 = vmatprep.subr.mxu0 0.0
    %78 = vmatpush1.msra.mxu0 0.0
    %79 = vmatprep.subr.mxu0 0.0
    %80 = vmatpush1.msra.mxu0 0.0
    %81 = vmatprep.subr.mxu0 0.0
    %82 = vmatpush1.msra.mxu0 0.0
    %83 = vmatprep.subr.mxu0 0.0
    %84 = vmatpush1.msra.mxu0 0.0
    %85 = vmatprep.subr.mxu0 0.0
    %86 = vmatpush1.msra.mxu0 0.0
    %87 = vmatprep.subr.mxu0 0.0
    %88 = vmatpush1.msra.mxu0 0.0
    %89 = vmatprep.subr.mxu0 0.0
    %90 = vmatpush1.msra.mxu0 0.0
    %91 = vmatprep.subr.mxu0 0.0
    %92 = vmatpush1.msra.mxu0 0.0
    %93 = vmatprep.subr.mxu0 0.0
    %94 = vmatpush1.msra.mxu0 0.0
    %95 = vmatprep.subr.mxu0 0.0
    %96 = vmatpush1.msra.mxu0 0.0
    %97 = vmatprep.subr.mxu0 0.0
    %98 = vmatpush1.msra.mxu0 0.0
    %99 = vmatprep.subr.mxu0 0.0
    %100 = vmatpush1.msra.mxu0 0.0
    %101 = vmatprep.subr.mxu0 0.0
    %102 = vmatpush1.msra.mxu0 0.0
    %103 = vmatprep.mubr.f32.mxu0 0.0
    %104 = vmatmul.mubr.f32.gmra.mrb[0].mxu0 %v37
    %v105 = vpop.f32.mrb[0].mxu0
    %v106 = vadd.f32 0.0, %v105
    %v107 = vpop.f32.mrb[0].mxu0
    %v108 = vadd.f32 0.0, %v107
    %109 = vdwg.mxu0
    %110 = vmatprep.subr.mxu0 %v22
    %111 = vmatpush1.msra.mxu0 %v21
    %112 = vmatprep.subr.mxu0 %v26
    %113 = vmatpush1.msra.mxu0 %v25
    %114 = vmatprep.subr.mxu0 %v30
    %115 = vmatpush1.msra.mxu0 %v29
    %116 = vmatprep.subr.mxu0 %v34
    %117 = vmatpush1.msra.mxu0 %v33
    %118 = vmatprep.subr.mxu0 0.0
    %119 = vmatpush1.msra.mxu0 0.0
    %120 = vmatprep.subr.mxu0 0.0
    %121 = vmatpush1.msra.mxu0 0.0
    %122 = vmatprep.subr.mxu0 0.0
    %123 = vmatpush1.msra.mxu0 0.0
    %124 = vmatprep.subr.mxu0 0.0
    %125 = vmatpush1.msra.mxu0 0.0
    %126 = vmatprep.subr.mxu0 0.0
    %127 = vmatpush1.msra.mxu0 0.0
    %128 = vmatprep.subr.mxu0 0.0
    %129 = vmatpush1.msra.mxu0 0.0
    %130 = vmatprep.subr.mxu0 0.0
    %131 = vmatpush1.msra.mxu0 0.0
    %132 = vmatprep.subr.mxu0 0.0
    %133 = vmatpush1.msra.mxu0 0.0
    %134 = vmatprep.subr.mxu0 0.0
    %135 = vmatpush1.msra.mxu0 0.0
    %136 = vmatprep.subr.mxu0 0.0
    %137 = vmatpush1.msra.mxu0 0.0
    %138 = vmatprep.subr.mxu0 0.0
    %139 = vmatpush1.msra.mxu0 0.0
    %140 = vmatprep.subr.mxu0 0.0
    %141 = vmatpush1.msra.mxu0 0.0
    %142 = vmatprep.subr.mxu0 0.0
    %143 = vmatpush1.msra.mxu0 0.0
    %144 = vmatprep.subr.mxu0 0.0
    %145 = vmatpush1.msra.mxu0 0.0
    %146 = vmatprep.subr.mxu0 0.0
    %147 = vmatpush1.msra.mxu0 0.0
    %148 = vmatprep.subr.mxu0 0.0
    %149 = vmatpush1.msra.mxu0 0.0
    %150 = vmatprep.subr.mxu0 0.0
    %151 = vmatpush1.msra.mxu0 0.0
    %152 = vmatprep.subr.mxu0 0.0
    %153 = vmatpush1.msra.mxu0 0.0
    %154 = vmatprep.subr.mxu0 0.0
    %155 = vmatpush1.msra.mxu0 0.0
    %156 = vmatprep.subr.mxu0 0.0
    %157 = vmatpush1.msra.mxu0 0.0
    %158 = vmatprep.subr.mxu0 0.0
    %159 = vmatpush1.msra.mxu0 0.0
    %160 = vmatprep.subr.mxu0 0.0
    %161 = vmatpush1.msra.mxu0 0.0
    %162 = vmatprep.subr.mxu0 0.0
    %163 = vmatpush1.msra.mxu0 0.0
    %164 = vmatprep.subr.mxu0 0.0
    %165 = vmatpush1.msra.mxu0 0.0
    %166 = vmatprep.subr.mxu0 0.0
    %167 = vmatpush1.msra.mxu0 0.0
    %168 = vmatprep.subr.mxu0 0.0
    %169 = vmatpush1.msra.mxu0 0.0
    %170 = vmatprep.subr.mxu0 0.0
    %171 = vmatpush1.msra.mxu0 0.0
    %172 = vmatprep.subr.mxu0 0.0
    %173 = vmatpush1.msra.mxu0 0.0
    %174 = vmatprep.mubr.f32.mxu0 0.0
    %175 = vmatmul.mubr.f32.gmra.mrb[0].mxu0 %v37
    %v176 = vpop.f32.mrb[0].mxu0
    %v177 = vadd.f32 0.0, %v176
    %v178 = vpop.f32.mrb[0].mxu0
    %v179 = vadd.f32 0.0, %v178
    %180 = vdwg.mxu0
    %v181 = vld [vmem:[%s2] sm:$0xff]
    %v182 = vld [vmem:[%s2 + $0x8] sm:$0xff]
    %v183 = vld [vmem:[%s2 + $0x10] sm:$0xff]
    %v184 = vld [vmem:[%s2 + $0x18] sm:$0xff]
    %v185 = vld [vmem:[%s2 + $0x20] sm:$0xff]
    %v186 = vld [vmem:[%s2 + $0x28] sm:$0xff]
    %v187 = vld [vmem:[%s2 + $0x30] sm:$0xff]
    %v188 = vld [vmem:[%s2 + $0x38] sm:$0xff]
    %v189 = vld [vmem:[%s2 + $0x40] sm:$0xff]
    %v190 = vld [vmem:[%s2 + $0x48] sm:$0xff]
    %v191 = vld [vmem:[%s2 + $0x50] sm:$0xff]
    %v192 = vld [vmem:[%s2 + $0x58] sm:$0xff]
    %v193 = vld [vmem:[%s2 + $0x60] sm:$0xff]
    %v194 = vld [vmem:[%s2 + $0x68] sm:$0xff]
    %v195 = vld [vmem:[%s2 + $0x70] sm:$0xff]
    %v196 = vld [vmem:[%s2 + $0x78] sm:$0xff]
    %v197 = vmul.f32 %v181, %v19
    %v198 = vmul.f32 %v182, %v20
    %v199 = vmul.f32 %v183, %v21
    %v200 = vmul.f32 %v184, %v22
    %v201 = vmul.f32 %v185, %v23
    %v202 = vmul.f32 %v186, %v24
    %v203 = vmul.f32 %v187, %v25
    %v204 = vmul.f32 %v188, %v26
    %v205 = vmul.f32 %v189, %v27
    %v206 = vmul.f32 %v190, %v28
    %v207 = vmul.f32 %v191, %v29
    %v208 = vmul.f32 %v192, %v30
    %v209 = vmul.f32 %v193, %v31
    %v210 = vmul.f32 %v194, %v32
    %v211 = vmul.f32 %v195, %v33
    %v212 = vmul.f32 %v196, %v34
    %v213 = vadd.f32 %v197, %v201
    %v214 = vadd.f32 %v213, %v205
    %v215 = vadd.f32 %v214, %v209
    %v216 = vrot.slane %v215, 4
    %v217 = vadd.f32 %v215, %v216
    %v218 = vrot.slane %v217, 2
    %v219 = vadd.f32 %v217, %v218
    %v220 = vrot.slane %v219, 1
    %v221 = vadd.f32 %v219, %v220
    %v222 = vadd.f32 %v198, %v202
    %v223 = vadd.f32 %v222, %v206
    %v224 = vadd.f32 %v223, %v210
    %v225 = vrot.slane %v224, 4
    %v226 = vadd.f32 %v224, %v225
    %v227 = vrot.slane %v226, 2
    %v228 = vadd.f32 %v226, %v227
    %v229 = vrot.slane %v228, 1
    %v230 = vadd.f32 %v228, %v229
    %v231 = vadd.f32 %v199, %v203
    %v232 = vadd.f32 %v231, %v207
    %v233 = vadd.f32 %v232, %v211
    %v234 = vrot.slane %v233, 4
    %v235 = vadd.f32 %v233, %v234
    %v236 = vrot.slane %v235, 2
    %v237 = vadd.f32 %v235, %v236
    %v238 = vrot.slane %v237, 1
    %v239 = vadd.f32 %v237, %v238
    %v240 = vadd.f32 %v200, %v204
    %v241 = vadd.f32 %v240, %v208
    %v242 = vadd.f32 %v241, %v212
    %v243 = vrot.slane %v242, 4
    %v244 = vadd.f32 %v242, %v243
    %v245 = vrot.slane %v244, 2
    %v246 = vadd.f32 %v244, %v245
    %v247 = vrot.slane %v246, 1
    %v248 = vadd.f32 %v246, %v247
    %v249 = vsub.f32 %v106, %v221
    %v250 = vsub.f32 %v108, %v230
    %v251 = vsub.f32 %v177, %v239
    %v252 = vsub.f32 %v179, %v248
    %v253 = vmul.f32 %v249, %v249
    %v254 = vmul.f32 %v250, %v250
    %v255 = vmul.f32 %v251, %v251
    %v256 = vmul.f32 %v252, %v252
    %v257 = vld [vmem:[%s3] sm:$0xff]
    %v258 = vld [vmem:[%s3 + $0x8] sm:$0xff]
    %v259 = vld [vmem:[%s3 + $0x10] sm:$0xff]
    %v260 = vld [vmem:[%s3 + $0x18] sm:$0xff]
    %v261 = vld [vmem:[%s3 + $0x20] sm:$0xff]
    %v262 = vld [vmem:[%s3 + $0x28] sm:$0xff]
    %v263 = vld [vmem:[%s3 + $0x30] sm:$0xff]
    %v264 = vld [vmem:[%s3 + $0x38] sm:$0xff]
    %v265 = vld [vmem:[%s3 + $0x40] sm:$0xff]
    %v266 = vld [vmem:[%s3 + $0x48] sm:$0xff]
    %v267 = vld [vmem:[%s3 + $0x50] sm:$0xff]
    %v268 = vld [vmem:[%s3 + $0x58] sm:$0xff]
    %v269 = vld [vmem:[%s3 + $0x60] sm:$0xff]
    %v270 = vld [vmem:[%s3 + $0x68] sm:$0xff]
    %v271 = vld [vmem:[%s3 + $0x70] sm:$0xff]
    %v272 = vld [vmem:[%s3 + $0x78] sm:$0xff]
    %v273 = vld [vmem:[%s3 + $0x80] sm:$0xff]
    %v274 = vld [vmem:[%s3 + $0x88] sm:$0xff]
    %v275 = vld [vmem:[%s3 + $0x90] sm:$0xff]
    %v276 = vld [vmem:[%s3 + $0x98] sm:$0xff]
    %v277 = vld [vmem:[%s3 + $0xa0] sm:$0xff]
    %v278 = vld [vmem:[%s3 + $0xa8] sm:$0xff]
    %v279 = vld [vmem:[%s3 + $0xb0] sm:$0xff]
    %v280 = vld [vmem:[%s3 + $0xb8] sm:$0xff]
    %v281 = vld [vmem:[%s3 + $0xc0] sm:$0xff]
    %v282 = vld [vmem:[%s3 + $0xc8] sm:$0xff]
    %v283 = vld [vmem:[%s3 + $0xd0] sm:$0xff]
    %v284 = vld [vmem:[%s3 + $0xd8] sm:$0xff]
    %v285 = vld [vmem:[%s3 + $0xe0] sm:$0xff]
    %v286 = vld [vmem:[%s3 + $0xe8] sm:$0xff]
    %v287 = vld [vmem:[%s3 + $0xf0] sm:$0xff]
    %v288 = vld [vmem:[%s3 + $0xf8] sm:$0xff]
    %v289 = vld [vmem:[%s3 + $0x100] sm:$0xff]
    %v290 = vld [vmem:[%s3 + $0x108] sm:$0xff]
    %v291 = vld [vmem:[%s3 + $0x110] sm:$0xff]
    %v292 = vld [vmem:[%s3 + $0x118] sm:$0xff]
    %v293 = vld [vmem:[%s3 + $0x120] sm:$0xff]
    %v294 = vld [vmem:[%s3 + $0x128] sm:$0xff]
    %v295 = vld [vmem:[%s3 + $0x130] sm:$0xff]
    %v296 = vld [vmem:[%s3 + $0x138] sm:$0xff]
    %v297 = vld [vmem:[%s3 + $0x140] sm:$0xff]
    %v298 = vld [vmem:[%s3 + $0x148] sm:$0xff]
    %v299 = vld [vmem:[%s3 + $0x150] sm:$0xff]
    %v300 = vld [vmem:[%s3 + $0x158] sm:$0xff]
    %v301 = vld [vmem:[%s3 + $0x160] sm:$0xff]
    %v302 = vld [vmem:[%s3 + $0x168] sm:$0xff]
    %v303 = vld [vmem:[%s3 + $0x170] sm:$0xff]
    %v304 = vld [vmem:[%s3 + $0x178] sm:$0xff]
    %v305 = vld [vmem:[%s3 + $0x180] sm:$0xff]
    %v306 = vld [vmem:[%s3 + $0x188] sm:$0xff]
    %v307 = vld [vmem:[%s3 + $0x190] sm:$0xff]
    %v308 = vld [vmem:[%s3 + $0x198] sm:$0xff]
    %v309 = vld [vmem:[%s3 + $0x1a0] sm:$0xff]
    %v310 = vld [vmem:[%s3 + $0x1a8] sm:$0xff]
    %v311 = vld [vmem:[%s3 + $0x1b0] sm:$0xff]
    %v312 = vld [vmem:[%s3 + $0x1b8] sm:$0xff]
    %v313 = vld [vmem:[%s3 + $0x1c0] sm:$0xff]
    %v314 = vld [vmem:[%s3 + $0x1c8] sm:$0xff]
    %v315 = vld [vmem:[%s3 + $0x1d0] sm:$0xff]
    %v316 = vld [vmem:[%s3 + $0x1d8] sm:$0xff]
    %v317 = vld [vmem:[%s3 + $0x1e0] sm:$0xff]
    %v318 = vld [vmem:[%s3 + $0x1e8] sm:$0xff]
    %v319 = vld [vmem:[%s3 + $0x1f0] sm:$0xff]
    %v320 = vld [vmem:[%s3 + $0x1f8] sm:$0xff]
    %321 = vmatprep.subr.mxu0 0.0
    %322 = vmatpush1.msra.mxu0 %v257
    %323 = vmatprep.subr.mxu0 0.0
    %324 = vmatpush1.msra.mxu0 %v258
    %325 = vmatprep.subr.mxu0 0.0
    %326 = vmatpush1.msra.mxu0 %v259
    %327 = vmatprep.subr.mxu0 0.0
    %328 = vmatpush1.msra.mxu0 %v260
    %329 = vmatprep.subr.mxu0 0.0
    %330 = vmatpush1.msra.mxu0 %v261
    %331 = vmatprep.subr.mxu0 0.0
    %332 = vmatpush1.msra.mxu0 %v262
    %333 = vmatprep.subr.mxu0 0.0
    %334 = vmatpush1.msra.mxu0 %v263
    %335 = vmatprep.subr.mxu0 0.0
    %336 = vmatpush1.msra.mxu0 %v264
    %337 = vmatprep.subr.mxu0 0.0
    %338 = vmatpush1.msra.mxu0 %v265
    %339 = vmatprep.subr.mxu0 0.0
    %340 = vmatpush1.msra.mxu0 %v266
    %341 = vmatprep.subr.mxu0 0.0
    %342 = vmatpush1.msra.mxu0 %v267
    %343 = vmatprep.subr.mxu0 0.0
    %344 = vmatpush1.msra.mxu0 %v268
    %345 = vmatprep.subr.mxu0 0.0
    %346 = vmatpush1.msra.mxu0 %v269
    %347 = vmatprep.subr.mxu0 0.0
    %348 = vmatpush1.msra.mxu0 %v270
    %349 = vmatprep.subr.mxu0 0.0
    %350 = vmatpush1.msra.mxu0 %v271
    %351 = vmatprep.subr.mxu0 0.0
    %352 = vmatpush1.msra.mxu0 %v272
    %353 = vmatprep.subr.mxu0 0.0
    %354 = vmatpush1.msra.mxu0 %v273
    %355 = vmatprep.subr.mxu0 0.0
    %356 = vmatpush1.msra.mxu0 %v274
    %357 = vmatprep.subr.mxu0 0.0
    %358 = vmatpush1.msra.mxu0 %v275
    %359 = vmatprep.subr.mxu0 0.0
    %360 = vmatpush1.msra.mxu0 %v276
    %361 = vmatprep.subr.mxu0 0.0
    %362 = vmatpush1.msra.mxu0 %v277
    %363 = vmatprep.subr.mxu0 0.0
    %364 = vmatpush1.msra.mxu0 %v278
    %365 = vmatprep.subr.mxu0 0.0
    %366 = vmatpush1.msra.mxu0 %v279
    %367 = vmatprep.subr.mxu0 0.0
    %368 = vmatpush1.msra.mxu0 %v280
    %369 = vmatprep.subr.mxu0 0.0
    %370 = vmatpush1.msra.mxu0 %v281
    %371 = vmatprep.subr.mxu0 0.0
    %372 = vmatpush1.msra.mxu0 %v282
    %373 = vmatprep.subr.mxu0 0.0
    %374 = vmatpush1.msra.mxu0 %v283
    %375 = vmatprep.subr.mxu0 0.0
    %376 = vmatpush1.msra.mxu0 %v284
    %377 = vmatprep.subr.mxu0 0.0
    %378 = vmatpush1.msra.mxu0 %v285
    %379 = vmatprep.subr.mxu0 0.0
    %380 = vmatpush1.msra.mxu0 %v286
    %381 = vmatprep.subr.mxu0 0.0
    %382 = vmatpush1.msra.mxu0 %v287
    %383 = vmatprep.subr.mxu0 0.0
    %384 = vmatpush1.msra.mxu0 %v288
    %385 = vmatprep.mubr.f32.mxu0 %v254
    %386 = vmatmul.mubr.f32.gmra.mrb[0].mxu0 %v253
    %v387 = vpop.f32.mrb[0].mxu0
    %v388 = vadd.f32 0.0, %v387
    %v389 = vpop.f32.mrb[0].mxu0
    %390 = vdwg.mxu0
    %391 = vmatprep.subr.mxu0 0.0
    %392 = vmatpush1.msra.mxu0 %v289
    %393 = vmatprep.subr.mxu0 0.0
    %394 = vmatpush1.msra.mxu0 %v290
    %395 = vmatprep.subr.mxu0 0.0
    %396 = vmatpush1.msra.mxu0 %v291
    %397 = vmatprep.subr.mxu0 0.0
    %398 = vmatpush1.msra.mxu0 %v292
    %399 = vmatprep.subr.mxu0 0.0
    %400 = vmatpush1.msra.mxu0 %v293
    %401 = vmatprep.subr.mxu0 0.0
    %402 = vmatpush1.msra.mxu0 %v294
    %403 = vmatprep.subr.mxu0 0.0
    %404 = vmatpush1.msra.mxu0 %v295
    %405 = vmatprep.subr.mxu0 0.0
    %406 = vmatpush1.msra.mxu0 %v296
    %407 = vmatprep.subr.mxu0 0.0
    %408 = vmatpush1.msra.mxu0 %v297
    %409 = vmatprep.subr.mxu0 0.0
    %410 = vmatpush1.msra.mxu0 %v298
    %411 = vmatprep.subr.mxu0 0.0
    %412 = vmatpush1.msra.mxu0 %v299
    %413 = vmatprep.subr.mxu0 0.0
    %414 = vmatpush1.msra.mxu0 %v300
    %415 = vmatprep.subr.mxu0 0.0
    %416 = vmatpush1.msra.mxu0 %v301
    %417 = vmatprep.subr.mxu0 0.0
    %418 = vmatpush1.msra.mxu0 %v302
    %419 = vmatprep.subr.mxu0 0.0
    %420 = vmatpush1.msra.mxu0 %v303
    %421 = vmatprep.subr.mxu0 0.0
    %422 = vmatpush1.msra.mxu0 %v304
    %423 = vmatprep.subr.mxu0 0.0
    %424 = vmatpush1.msra.mxu0 %v305
    %425 = vmatprep.subr.mxu0 0.0
    %426 = vmatpush1.msra.mxu0 %v306
    %427 = vmatprep.subr.mxu0 0.0
    %428 = vmatpush1.msra.mxu0 %v307
    %429 = vmatprep.subr.mxu0 0.0
    %430 = vmatpush1.msra.mxu0 %v308
    %431 = vmatprep.subr.mxu0 0.0
    %432 = vmatpush1.msra.mxu0 %v309
    %433 = vmatprep.subr.mxu0 0.0
    %434 = vmatpush1.msra.mxu0 %v310
    %435 = vmatprep.subr.mxu0 0.0
    %436 = vmatpush1.msra.mxu0 %v311
    %437 = vmatprep.subr.mxu0 0.0
    %438 = vmatpush1.msra.mxu0 %v312
    %439 = vmatprep.subr.mxu0 0.0
    %440 = vmatpush1.msra.mxu0 %v313
    %441 = vmatprep.subr.mxu0 0.0
    %442 = vmatpush1.msra.mxu0 %v314
    %443 = vmatprep.subr.mxu0 0.0
    %444 = vmatpush1.msra.mxu0 %v315
    %445 = vmatprep.subr.mxu0 0.0
    %446 = vmatpush1.msra.mxu0 %v316
    %447 = vmatprep.subr.mxu0 0.0
    %448 = vmatpush1.msra.mxu0 %v317
    %449 = vmatprep.subr.mxu0 0.0
    %450 = vmatpush1.msra.mxu0 %v318
    %451 = vmatprep.subr.mxu0 0.0
    %452 = vmatpush1.msra.mxu0 %v319
    %453 = vmatprep.subr.mxu0 0.0
    %454 = vmatpush1.msra.mxu0 %v320
    %455 = vmatprep.mubr.f32.mxu0 %v256
    %456 = vmatmul.mubr.f32.gmra.mrb[0].mxu0 %v255
    %v457 = vpop.f32.mrb[0].mxu0
    %v458 = vadd.f32 %v388, %v457
    %v459 = vpop.f32.mrb[0].mxu0
    %460 = vdwg.mxu0
    %v461 = vrsqrt.pop %v458
    %v462 = vmul.f32 %v458, %v461
    %vm463 = vcmp.eq.f32.partialorder %v458, inf
    %v464 = vsel %vm463, %v458, %v462
    %vm465 = vcmp.eq.f32.partialorder %v458, 0.0
    %v466 = vand.u32 %v458, 2147483648
    %v467 = vsel %vm465, %v466, %v464
    %vm468 = vcmask 130048
    %469 = vst.msk [vmem:[#allocation2] sm:$0xff] %vm468, %v467
    // Predicated region
    $region18: #{linear_gml2_forward.1} parent=1 // pred_check
      _
    $region19: #{linear_gml2_forward.1} parent=1 // pred_check_branch
      %471 = sbr.rel (0) target = $region21
    $region20: #{linear_gml2_forward.1} parent=1 // pred_region
      %s473 = ssub.s32 128, 128
      %474 = vsyncadd [#allocation3], %s473
      %s476 = sshll.u32 [#allocation2], 4
      %s477 = int_to_ptr.vmem [resolvable:$true] %s476
      %479 = dma.vmem_to_hbm [thread:$0]  %s477, 128, %s4, [#allocation3]
    $region21: #{linear_gml2_forward.1} parent=1 // pred_fallthru
      _
    // Predicated region
    $region22: #{linear_gml2_forward.1} parent=1 // pred_check
      _
    $region23: #{linear_gml2_forward.1} parent=1 // pred_check_branch
      %481 = sbr.rel (0) target = $region25
    $region24: #{linear_gml2_forward.1} parent=1 // pred_region
      %482 = dma.done [#allocation3], 128
    $region25: #{linear_gml2_forward.1} parent=1 // pred_fallthru
      _
    %483 = vsyncpa [#allocation3], 1

</llo_original>
